<compile_context>
chip_gen: v7x
topology: tpu7x:2x2x1
jax: 0.10.0
libtpu: 0.0.40
codegen_flags: <defaults>
</compile_context>

<pallas_src>
import jax
import jax.numpy as jnp
from jax.experimental import pallas as pl
from jax.experimental.pallas import tpu as pltpu

LANES = 128   # output slab lane width (one full vreg lane span)
SUB = 16      # sublane multiple for bf16-packed batch tiles


def cnbb_kernel(x_ref, wg_ref, bg_ref, wf_ref, bf_ref, slab_ref):
    x = x_ref[...]                                                # (TB, 512) bf16

    # g: Linear(512, 50) + Tanh in a 128-lane padded layout.
    # Padded Wg columns / bg lanes are zero -> tanh(0) = 0 exactly.
    feat = jnp.tanh(
        jnp.dot(x, wg_ref[...], preferred_element_type=jnp.float32)
        + bg_ref[...])                                            # (TB, 128) f32

    # f: Linear(50, 10) + Softmax(dim=1).
    # Wf is packed so real logits land in lanes [50:60]; every other lane gets
    # a -1e30 bias so exp() underflows it to 0 and the full-width softmax is
    # exactly the softmax over the 10 real logits.  feat is tanh-bounded, so
    # the real logits are small and no max-subtraction is needed.
    logits = (jnp.dot(feat.astype(jnp.bfloat16), wf_ref[...],
                      preferred_element_type=jnp.float32)
              + bf_ref[...])                                      # (TB, 128) f32
    e = jnp.exp(logits)
    out = e / jnp.sum(e, axis=1, keepdims=True)                   # exact rows-sum-to-1

    # Lane-dense packed output: feat occupies lanes [0:50] (zeros elsewhere),
    # out occupies lanes [50:60] (zeros elsewhere) -> a plain add packs them.
    slab_ref[...] = feat + out


def _round_up(n, m):
    return (n + m - 1) // m * m


def _compute_tiling(B, tile_b):
    """Even batch split, tiles a multiple of SUB, >=2 grid steps when possible."""
    tile_b = max(SUB, _round_up(tile_b, SUB))
    steps = pl.cdiv(B, tile_b)
    if B >= 2 * SUB:
        steps = max(steps, 2)          # let v7x megacore shard the batch axis
    tb = _round_up(pl.cdiv(B, steps), SUB)
    steps = pl.cdiv(B, tb)
    return tb, steps * tb, steps


def cnbb_forward(x, wg, bg, wf, bf, ww, bw, *, tile_b=2048):
    """Returns (features, weights, outputs) matching the PyTorch CNBB module.

    Weights are stored transposed vs. PyTorch: wg (512, 50), wf (50, 10),
    ww (50, 1). `ww`/`bw` are accepted for interface parity but unused: the
    softmax over a size-1 axis is identically 1.0.
    """
    del ww, bw  # softmax over a size-1 dim is always 1.0

    B, IN = x.shape
    H = wg.shape[1]          # 50
    O = wf.shape[1]          # 10
    assert H + O <= LANES

    tb, Bp, steps = _compute_tiling(B, tile_b)

    # HBM-side x tile in bf16 (halves the dominant HBM read).
    x = x.astype(jnp.bfloat16)
    if Bp != B:
        x = jnp.pad(x, ((0, Bp - B), (0, 0)))

    # One-time lane-dense packing of the (tiny) parameters.
    wg_pad = jnp.zeros((IN, LANES), jnp.bfloat16).at[:, :H].set(
        wg.astype(jnp.bfloat16))
    bg_pad = jnp.zeros((1, LANES), jnp.float32).at[:, :H].set(bg)
    wf_pad = jnp.zeros((LANES, LANES), jnp.bfloat16).at[:H, H:H + O].set(
        wf.astype(jnp.bfloat16))
    bf_pad = jnp.full((1, LANES), -1e30, jnp.float32).at[:, H:H + O].set(bf)

    slab = pl.pallas_call(
        cnbb_kernel,
        out_shape=jax.ShapeDtypeStruct((Bp, LANES), jnp.float32),
        grid_spec=pl.GridSpec(
            grid=(steps,),
            in_specs=[
                pl.BlockSpec((tb, IN), lambda i: (i, 0)),        # x (tiled)
                pl.BlockSpec((IN, LANES), lambda i: (0, 0)),     # Wg (resident)
                pl.BlockSpec((1, LANES), lambda i: (0, 0)),      # bg (resident)
                pl.BlockSpec((LANES, LANES), lambda i: (0, 0)),  # Wf (resident)
                pl.BlockSpec((1, LANES), lambda i: (0, 0)),      # bf (resident)
            ],
            out_specs=pl.BlockSpec((tb, LANES), lambda i: (i, 0)),
        ),
        compiler_params=pltpu.CompilerParams(
            dimension_semantics=("parallel",)),
    )(x, wg_pad, bg_pad, wf_pad, bf_pad)

    features = slab[:B, :H]
    outputs = slab[:B, H:H + O]
    weights = jnp.ones((B, 1), jnp.float32)   # softmax over size-1 axis == 1
    return features, weights, outputs


def init_params(key):
    """Deterministic PyTorch-style Linear init: U(-1/sqrt(fan_in), +1/sqrt(fan_in))."""
    def linear(key, fan_in, fan_out):
        k1, k2 = jax.random.split(key)
        bound = 1.0 / jnp.sqrt(fan_in)
        w = jax.random.uniform(k1, (fan_in, fan_out), jnp.float32, -bound, bound)
        b = jax.random.uniform(k2, (fan_out,), jnp.float32, -bound, bound)
        return w, b

    kg, kf, kw = jax.random.split(key, 3)
    wg, bg = linear(kg, 512, 50)   # self.g
    wf, bf = linear(kf, 50, 10)    # self.f
    ww, bw = linear(kw, 50, 1)     # self.w
    return wg, bg, wf, bf, ww, bw


if __name__ == "__main__":
    key = jax.random.PRNGKey(0)
    kx, kp = jax.random.split(key)

    B = 30  # deliberately not a multiple of the tile to exercise padding
    x = jax.random.normal(kx, (B, 512), jnp.float32)
    wg, bg, wf, bf, ww, bw = init_params(kp)

    # Small tile so the batch grid actually has several steps in this test.
    features, weights, outputs = cnbb_forward(x, wg, bg, wf, bf, ww, bw,
                                              tile_b=16)
    jax.block_until_ready((features, weights, outputs))

    # Reference check in plain JAX (fp32). The kernel's matmuls run in bf16
    # with fp32 accumulation, so tolerances are ~1e-2.
    feat_ref = jnp.tanh(x @ wg + bg)
    wgt_ref = jax.nn.softmax(feat_ref @ ww + bw, axis=1)   # == ones
    out_ref = jax.nn.softmax(feat_ref @ wf + bf, axis=1)
    assert features.shape == (B, 50) and outputs.shape == (B, 10)
    assert weights.shape == (B, 1)
    assert jnp.allclose(features, feat_ref, atol=2e-2), "features mismatch"
    assert jnp.allclose(weights, wgt_ref, atol=1e-6), "weights mismatch"
    assert jnp.allclose(outputs, out_ref, atol=2e-2), "outputs mismatch"
    assert jnp.allclose(outputs.sum(axis=1), 1.0, atol=1e-5), "softmax rows"

    print("KERNEL_OK")
</pallas_src>

<mosaic_0001>
module attributes {stable_mosaic.version = 11 : i64} {
  func.func @cnbb_kernel(%arg0: i32, %arg1: memref<16x512xbf16, #tpu.memory_space<vmem>>, %arg2: memref<512x128xbf16, #tpu.memory_space<vmem>>, %arg3: memref<1x128xf32, #tpu.memory_space<vmem>>, %arg4: memref<128x128xbf16, #tpu.memory_space<vmem>>, %arg5: memref<1x128xf32, #tpu.memory_space<vmem>>, %arg6: memref<16x128xf32, #tpu.memory_space<vmem>>) attributes {dimension_semantics = [#tpu.dimension_semantics<parallel>], iteration_bounds = array<i64: 2>, scalar_prefetch = 0 : i64, scratch_operands = 0 : i64, tpu.core_type = #tpu.core_type<tc>, window_params = [{transform_indices = @transform_0, window_bounds = array<i64: 16, 512>}, {pipeline_mode = #tpu.pipeline_mode<synchronous>, transform_indices = @transform_1, window_bounds = array<i64: 512, 128>}, {pipeline_mode = #tpu.pipeline_mode<synchronous>, transform_indices = @transform_2, window_bounds = array<i64: 1, 128>}, {pipeline_mode = #tpu.pipeline_mode<synchronous>, transform_indices = @transform_3, window_bounds = array<i64: 128, 128>}, {pipeline_mode = #tpu.pipeline_mode<synchronous>, transform_indices = @transform_4, window_bounds = array<i64: 1, 128>}, {transform_indices = @transform_5, window_bounds = array<i64: 16, 128>}]} {
    %c0 = arith.constant 0 : index
    %c0_0 = arith.constant 0 : index
    %0 = vector.load %arg1[%c0, %c0_0] : memref<16x512xbf16, #tpu.memory_space<vmem>>, vector<16x512xbf16>
    %c0_1 = arith.constant 0 : index
    %c0_2 = arith.constant 0 : index
    %1 = vector.load %arg2[%c0_1, %c0_2] : memref<512x128xbf16, #tpu.memory_space<vmem>>, vector<512x128xbf16>
    %cst = arith.constant dense<0.000000e+00> : vector<16x128xf32>
    %2 = tpu.matmul %0, %1, %cst {dimension_numbers = #tpu.dot_dimension_numbers<[1], [0], [0], [1], [0, 0, 1, 1], [], []>} : vector<16x512xbf16>, vector<512x128xbf16>, vector<16x128xf32> -> vector<16x128xf32>
    %c0_3 = arith.constant 0 : index
    %c0_4 = arith.constant 0 : index
    %3 = vector.load %arg3[%c0_3, %c0_4] : memref<1x128xf32, #tpu.memory_space<vmem>>, vector<1x128xf32>
    %4 = vector.broadcast %3 : vector<1x128xf32> to vector<16x128xf32>
    %5 = arith.addf %2, %4 : vector<16x128xf32>
    %6 = math.tanh %5 : vector<16x128xf32>
    %7 = arith.truncf %6 : vector<16x128xf32> to vector<16x128xbf16>
    %c0_5 = arith.constant 0 : index
    %c0_6 = arith.constant 0 : index
    %8 = vector.load %arg4[%c0_5, %c0_6] : memref<128x128xbf16, #tpu.memory_space<vmem>>, vector<128x128xbf16>
    %cst_7 = arith.constant dense<0.000000e+00> : vector<16x128xf32>
    %9 = tpu.matmul %7, %8, %cst_7 {dimension_numbers = #tpu.dot_dimension_numbers<[1], [0], [0], [1], [0, 0, 1, 1], [], []>} : vector<16x128xbf16>, vector<128x128xbf16>, vector<16x128xf32> -> vector<16x128xf32>
    %c0_8 = arith.constant 0 : index
    %c0_9 = arith.constant 0 : index
    %10 = vector.load %arg5[%c0_8, %c0_9] : memref<1x128xf32, #tpu.memory_space<vmem>>, vector<1x128xf32>
    %11 = vector.broadcast %10 : vector<1x128xf32> to vector<16x128xf32>
    %12 = arith.addf %9, %11 : vector<16x128xf32>
    %13 = math.exp %12 : vector<16x128xf32>
    %cst_10 = arith.constant dense<0.000000e+00> : vector<16xf32>
    %14 = vector.multi_reduction <add>, %13, %cst_10 [1] : vector<16x128xf32> to vector<16xf32>
    %15 = vector.shape_cast %14 : vector<16xf32> to vector<16x1xf32>
    %16 = vector.broadcast %15 : vector<16x1xf32> to vector<16x128xf32>
    %17 = arith.divf %13, %16 : vector<16x128xf32>
    %18 = arith.addf %6, %17 : vector<16x128xf32>
    %c0_11 = arith.constant 0 : index
    %c0_12 = arith.constant 0 : index
    %19 = vector.load %arg6[%c0_11, %c0_12] : memref<16x128xf32, #tpu.memory_space<vmem>>, vector<16x128xf32>
    tpu.vector_store %arg6[%c0_11, %c0_12], %18 {strides = array<i32>} : memref<16x128xf32, #tpu.memory_space<vmem>>, vector<16x128xf32>,
    return
  }
  func.func @transform_0(%arg0: i32) -> (i32, i32) {
    %c0_i32 = arith.constant 0 : i32
    %c0_i32_0 = arith.constant 0 : i32
    return %arg0, %c0_i32 : i32, i32
  }
  func.func @transform_1(%arg0: i32) -> (i32, i32) {
    %c0_i32 = arith.constant 0 : i32
    %c0_i32_0 = arith.constant 0 : i32
    %c0_i32_1 = arith.constant 0 : i32
    return %c0_i32, %c0_i32_0 : i32, i32
  }
  func.func @transform_2(%arg0: i32) -> (i32, i32) {
    %c0_i32 = arith.constant 0 : i32
    %c0_i32_0 = arith.constant 0 : i32
    %c0_i32_1 = arith.constant 0 : i32
    return %c0_i32, %c0_i32_0 : i32, i32
  }
  func.func @transform_3(%arg0: i32) -> (i32, i32) {
    %c0_i32 = arith.constant 0 : i32
    %c0_i32_0 = arith.constant 0 : i32
    %c0_i32_1 = arith.constant 0 : i32
    return %c0_i32, %c0_i32_0 : i32, i32
  }
  func.func @transform_4(%arg0: i32) -> (i32, i32) {
    %c0_i32 = arith.constant 0 : i32
    %c0_i32_0 = arith.constant 0 : i32
    %c0_i32_1 = arith.constant 0 : i32
    return %c0_i32, %c0_i32_0 : i32, i32
  }
  func.func @transform_5(%arg0: i32) -> (i32, i32) {
    %c0_i32 = arith.constant 0 : i32
    %c0_i32_0 = arith.constant 0 : i32
    return %arg0, %c0_i32 : i32, i32
  }
}

</mosaic_0001>

<llo_original>
// kernel: tpu_custom_call.1
$region0: #{tpu_custom_call.1}
  #allocation0 [shape = 'u32[]', space=smem, size = 0x4, offset = 0x4, fixed_abs, tag = 'smem constant byte address 0x4 - core index']
  #allocation1 [shape = 'u32[144,128]{1,0:T(1,128)}', space=vmem, size = 0x12000, scoped, tag = 'internal scratch']
  %s0 = inlined_call_operand.hbm [shape: bf16[32,512], index: 0, kind: input, shape index: {}]
  %s1 = inlined_call_operand.hbm [shape: bf16[512,128], index: 1, kind: input, shape index: {}]
  %s2 = inlined_call_operand.vmem [shape: f32[1,128], index: 2, kind: input, shape index: {}]
  %s3 = inlined_call_operand.hbm [shape: bf16[128,128], index: 3, kind: input, shape index: {}]
  %s4 = inlined_call_operand.vmem [shape: f32[1,128], index: 4, kind: input, shape index: {}]
  %s5 = inlined_call_operand.hbm [shape: f32[32,128], index: 5, kind: output, shape index: {}]
  %s6 = sld [smem:[#allocation0]]
  $region65: #{tpu_custom_call.1} parent=0
    _
  %s8 = ssub.s32 1, %s6
  %s9 = scalar_select 0, %s8, %s6
  $region1: #{tpu_custom_call.1} parent=0
    #allocation2 [shape = 'u8[32768]{0}', space=vmem, size = 0x8000, scoped, tag = 'input window, operand 0']
    #allocation3 [shape = 's32[2]{0}', space=sflag, size = 0x8, scoped, tag = 'scoped memory for tpu_custom_call.1']
    #allocation4 [shape = 's32[2]{0}', space=sflag, size = 0x8, scoped, tag = 'scoped memory for tpu_custom_call.1']
    #allocation5 [shape = 'u8[131072]{0}', space=vmem, size = 0x20000, scoped, tag = 'input window, operand 1, single buffered']
    #allocation6 [shape = 's32[1]{0}', space=sflag, size = 0x4, scoped, tag = 'scoped memory for tpu_custom_call.1']
    #allocation7 [shape = 'u8[32768]{0}', space=vmem, size = 0x8000, scoped, tag = 'input window, operand 3, single buffered']
    #allocation8 [shape = 'u8[16384]{0}', space=vmem, size = 0x4000, scoped, tag = 'output window, operand 0']
    %10 = vsyncpa [#allocation3], 0
    %s11 = scalar_lea.sflag [#allocation3], 1
    %12 = vsyncpa %s11, 0
    %13 = vsyncpa [#allocation6], 0
    %14 = vsyncpa [#allocation4], 0
    %s15 = scalar_lea.sflag [#allocation4], 1
    %16 = vsyncpa %s15, 0
    loop: start=0, step=1, limit=4
    $region2: #{tpu_custom_call.1} parent=1 // loop_pre_header
      _
    $region3: #{tpu_custom_call.1} parent=1 // loop_header
      %s18 = sphi 0, %s22
      %p19 = scmp.ge.s32.totalorder %s18, 4
      %s28 = sphi 0, %s30
      %s31 = sphi 0, %s28
      %s32 = sphi 0, %s31
      %s48 = sphi 0, %s32
      %s52 = sphi 0, %s52
      %s54 = sphi 0, %s52
      %s55 = sphi 0, %s54
      %s69 = sphi 0, %s55
      %s73 = sphi 0, %s73
      %s75 = sphi 0, %s73
      %s76 = sphi 0, %s75
      %s90 = sphi 0, %s76
      %s94 = sphi 0, %s94
      %s96 = sphi 0, %s94
      %s97 = sphi 0, %s96
      %s111 = sphi 0, %s97
      %s115 = sphi 0, %s115
      %s117 = sphi 0, %s115
      %s118 = sphi 0, %s117
      %s132 = sphi 0, %s118
      %s138 = sphi 0, %s140
      %s141 = sphi 0, %s138
      %s142 = sphi 0, %s141
      %s158 = sphi 0, %s142
    $region4: #{tpu_custom_call.1} parent=1 // loop_header_branch
      %21 = sbr.rel (%p19) target = $region8
    $region5: #{tpu_custom_call.1} parent=1 // loop_body
      %s23 = ssub.s32 %s18, 1
      %s24 = ssub.s32 %s18, 2
      %s25 = sadd.s32 %s18, 1
      %s26 = ssub.s32 %s18, %s25
      %p27 = scmp.eq.s32.totalorder %s26, 0
      %s29 = sadd.s32 %s28, 1
      %s30 = scalar_select %p27, %s28, %s29
      %p33 = pneg %p27
      %p34 = scmp.eq.s32.totalorder %s18, 1
      %p35 = por %p33, %p34
      %p36 = scmp.ne.s32.totalorder %s28, %s31
      %p37 = scmp.eq.s32.totalorder %s18, 0
      %p38 = por %p36, %p37
      %p39 = scmp.ne.s32.totalorder %s28, %s31
      %p40 = scmp.eq.s32.totalorder %s23, 1
      %p41 = por %p39, %p40
      %p42 = scmp.ne.s32.totalorder %s31, %s32
      %p43 = scmp.eq.s32.totalorder %s23, 0
      %p44 = por %p42, %p43
      %p45 = scmp.ne.s32.totalorder %s31, %s32
      %p46 = scmp.eq.s32.totalorder %s24, 1
      %p47 = por %p45, %p46
      %p49 = scmp.ne.s32.totalorder %s32, %s48
      %p50 = scmp.eq.s32.totalorder %s24, 0
      %p51 = por %p49, %p50
      %s53 = sadd.s32 %s52, 1
      %p56 = scmp.eq.s32.totalorder %s18, 1
      %p57 = scmp.ne.s32.totalorder %s52, %s54
      %p58 = scmp.eq.s32.totalorder %s18, 0
      %p59 = por %p57, %p58
      %p60 = scmp.ne.s32.totalorder %s52, %s54
      %p61 = scmp.eq.s32.totalorder %s23, 1
      %p62 = por %p60, %p61
      %p63 = scmp.ne.s32.totalorder %s54, %s55
      %p64 = scmp.eq.s32.totalorder %s23, 0
      %p65 = por %p63, %p64
      %p66 = scmp.ne.s32.totalorder %s54, %s55
      %p67 = scmp.eq.s32.totalorder %s24, 1
      %p68 = por %p66, %p67
      %p70 = scmp.ne.s32.totalorder %s55, %s69
      %p71 = scmp.eq.s32.totalorder %s24, 0
      %p72 = por %p70, %p71
      %s74 = sadd.s32 %s73, 1
      %p77 = scmp.eq.s32.totalorder %s18, 1
      %p78 = scmp.ne.s32.totalorder %s73, %s75
      %p79 = scmp.eq.s32.totalorder %s18, 0
      %p80 = por %p78, %p79
      %p81 = scmp.ne.s32.totalorder %s73, %s75
      %p82 = scmp.eq.s32.totalorder %s23, 1
      %p83 = por %p81, %p82
      %p84 = scmp.ne.s32.totalorder %s75, %s76
      %p85 = scmp.eq.s32.totalorder %s23, 0
      %p86 = por %p84, %p85
      %p87 = scmp.ne.s32.totalorder %s75, %s76
      %p88 = scmp.eq.s32.totalorder %s24, 1
      %p89 = por %p87, %p88
      %p91 = scmp.ne.s32.totalorder %s76, %s90
      %p92 = scmp.eq.s32.totalorder %s24, 0
      %p93 = por %p91, %p92
      %s95 = sadd.s32 %s94, 1
      %p98 = scmp.eq.s32.totalorder %s18, 1
      %p99 = scmp.ne.s32.totalorder %s94, %s96
      %p100 = scmp.eq.s32.totalorder %s18, 0
      %p101 = por %p99, %p100
      %p102 = scmp.ne.s32.totalorder %s94, %s96
      %p103 = scmp.eq.s32.totalorder %s23, 1
      %p104 = por %p102, %p103
      %p105 = scmp.ne.s32.totalorder %s96, %s97
      %p106 = scmp.eq.s32.totalorder %s23, 0
      %p107 = por %p105, %p106
      %p108 = scmp.ne.s32.totalorder %s96, %s97
      %p109 = scmp.eq.s32.totalorder %s24, 1
      %p110 = por %p108, %p109
      %p112 = scmp.ne.s32.totalorder %s97, %s111
      %p113 = scmp.eq.s32.totalorder %s24, 0
      %p114 = por %p112, %p113
      %s116 = sadd.s32 %s115, 1
      %p119 = scmp.eq.s32.totalorder %s18, 1
      %p120 = scmp.ne.s32.totalorder %s115, %s117
      %p121 = scmp.eq.s32.totalorder %s18, 0
      %p122 = por %p120, %p121
      %p123 = scmp.ne.s32.totalorder %s115, %s117
      %p124 = scmp.eq.s32.totalorder %s23, 1
      %p125 = por %p123, %p124
      %p126 = scmp.ne.s32.totalorder %s117, %s118
      %p127 = scmp.eq.s32.totalorder %s23, 0
      %p128 = por %p126, %p127
      %p129 = scmp.ne.s32.totalorder %s117, %s118
      %p130 = scmp.eq.s32.totalorder %s24, 1
      %p131 = por %p129, %p130
      %p133 = scmp.ne.s32.totalorder %s118, %s132
      %p134 = scmp.eq.s32.totalorder %s24, 0
      %p135 = por %p133, %p134
      %s136 = ssub.s32 %s18, %s25
      %p137 = scmp.eq.s32.totalorder %s136, 0
      %s139 = sadd.s32 %s138, 1
      %s140 = scalar_select %p137, %s138, %s139
      %p143 = pneg %p137
      %p144 = scmp.eq.s32.totalorder %s18, 1
      %p145 = por %p143, %p144
      %p146 = scmp.ne.s32.totalorder %s138, %s141
      %p147 = scmp.eq.s32.totalorder %s18, 0
      %p148 = por %p146, %p147
      %p149 = scmp.ne.s32.totalorder %s138, %s141
      %p150 = scmp.eq.s32.totalorder %s23, 1
      %p151 = por %p149, %p150
      %p152 = scmp.ne.s32.totalorder %s141, %s142
      %p153 = scmp.eq.s32.totalorder %s23, 0
      %p154 = por %p152, %p153
      %p155 = scmp.ne.s32.totalorder %s141, %s142
      %p156 = scmp.eq.s32.totalorder %s24, 1
      %p157 = por %p155, %p156
      %p159 = scmp.ne.s32.totalorder %s142, %s158
      %p160 = scmp.eq.s32.totalorder %s24, 0
      %p161 = por %p159, %p160
      %p162 = scmp.le.s32.totalorder 1, %s18
      %p163 = scmp.lt.s32.totalorder %s18, 3
      %p164 = pnand %p162, %p163
      %p165 = pneg %p164
      // Predicated region
      $region9: #{tpu_custom_call.1} parent=5 // pred_check
        _
      $region10: #{tpu_custom_call.1} parent=5 // pred_check_branch
        %167 = sbr.rel (%p164) target = $region12
      $region11: #{tpu_custom_call.1} parent=5 // pred_region
        %s168 = ssub.s32 %s18, 1
        // Predicated region
        $region13: #{tpu_custom_call.1} parent=11 // pred_check
          %p169 = pneg %p65
        $region14: #{tpu_custom_call.1} parent=11 // pred_check_branch
          %171 = sbr.rel (%p169) target = $region16
        $region15: #{tpu_custom_call.1} parent=11 // pred_region
          %s173 = ssub.s32 4096, 4096
          %174 = vsyncadd [#allocation6], %s173
          %s175 = sshll.u32 [#allocation5], 4
          %s176 = int_to_ptr.vmem [resolvable:$true] %s175
          %181 = dma.hbm_to_vmem [thread:$0]  %s1, 4096, %s176, [#allocation6], 64, 64, 4
        $region16: #{tpu_custom_call.1} parent=11 // pred_fallthru
          _
        // Predicated region
        $region17: #{tpu_custom_call.1} parent=11 // pred_check
          %p182 = pneg %p86
        $region18: #{tpu_custom_call.1} parent=11 // pred_check_branch
          %184 = sbr.rel (%p182) target = $region20
        $region19: #{tpu_custom_call.1} parent=11 // pred_region
          _
        $region20: #{tpu_custom_call.1} parent=11 // pred_fallthru
          _
        // Predicated region
        $region21: #{tpu_custom_call.1} parent=11 // pred_check
          %p185 = pneg %p107
        $region22: #{tpu_custom_call.1} parent=11 // pred_check_branch
          %187 = sbr.rel (%p185) target = $region24
        $region23: #{tpu_custom_call.1} parent=11 // pred_region
          %s189 = ssub.s32 1024, 1024
          %190 = vsyncadd [#allocation6], %s189
          %s191 = sshll.u32 [#allocation7], 4
          %s192 = int_to_ptr.vmem [resolvable:$true] %s191
          %197 = dma.hbm_to_vmem [thread:$0]  %s3, 1024, %s192, [#allocation6], 64, 64, 4
        $region24: #{tpu_custom_call.1} parent=11 // pred_fallthru
          _
        // Predicated region
        $region25: #{tpu_custom_call.1} parent=11 // pred_check
          %p198 = pneg %p128
        $region26: #{tpu_custom_call.1} parent=11 // pred_check_branch
          %200 = sbr.rel (%p198) target = $region28
        $region27: #{tpu_custom_call.1} parent=11 // pred_region
          _
        $region28: #{tpu_custom_call.1} parent=11 // pred_fallthru
          _
      $region12: #{tpu_custom_call.1} parent=5 // pred_fallthru
        _
      %p201 = scmp.lt.s32.totalorder %s18, 2
      // Predicated region
      $region29: #{tpu_custom_call.1} parent=5 // pred_check
        %p202 = pneg %p201
      $region30: #{tpu_custom_call.1} parent=5 // pred_check_branch
        %204 = sbr.rel (%p202) target = $region32
      $region31: #{tpu_custom_call.1} parent=5 // pred_region
        // Predicated region
        $region33: #{tpu_custom_call.1} parent=31 // pred_check
          %p205 = pneg %p38
        $region34: #{tpu_custom_call.1} parent=31 // pred_check_branch
          %207 = sbr.rel (%p205) target = $region36
        $region35: #{tpu_custom_call.1} parent=31 // pred_region
          %s208 = sand.u32 %s28, 1
          %s209 = scalar_lea.sflag [#allocation3], %s208
          %s210 = sand.u32 %s28, 1
          %s211 = smul.addr %s210, 32
          %s212 = scalar_lea.vmem [#allocation2], %s211
          %s213 = smul.u32 2, %s18
          %s215 = ssub.s32 512, 512
          %216 = vsyncadd %s209, %s215
          %s217 = smul.addr %s213, 4
          %s218 = smul.addr %s217, 64
          %s219 = scalar_lea.hbm %s0, %s218
          %s220 = sshll.u32 %s212, 4
          %s221 = int_to_ptr.vmem [resolvable:$true] %s220
          %226 = dma.hbm_to_vmem [thread:$0]  %s219, 512, %s221, %s209, 256, 256, 16
        $region36: #{tpu_custom_call.1} parent=31 // pred_fallthru
          _
      $region32: #{tpu_custom_call.1} parent=5 // pred_fallthru
        _
      %p227 = scmp.le.s32.totalorder 1, %s18
      %p228 = scmp.lt.s32.totalorder %s18, 3
      %p229 = pnand %p227, %p228
      %p230 = pneg %p229
      // Predicated region
      $region37: #{tpu_custom_call.1} parent=5 // pred_check
        _
      $region38: #{tpu_custom_call.1} parent=5 // pred_check_branch
        %232 = sbr.rel (%p229) target = $region40
      $region39: #{tpu_custom_call.1} parent=5 // pred_region
        %s233 = ssub.s32 %s18, 1
        %s234 = sand.u32 %s31, 1
        %s235 = scalar_lea.sflag [#allocation3], %s234
        %s236 = sand.u32 %s31, 1
        %s237 = smul.addr %s236, 32
        %s238 = scalar_lea.vmem [#allocation2], %s237
        // Predicated region
        $region41: #{tpu_custom_call.1} parent=39 // pred_check
          %p239 = pneg %p44
        $region42: #{tpu_custom_call.1} parent=39 // pred_check_branch
          %241 = sbr.rel (%p239) target = $region44
        $region43: #{tpu_custom_call.1} parent=39 // pred_region
          %242 = dma.done %s235, 512
        $region44: #{tpu_custom_call.1} parent=39 // pred_fallthru
          _
        // Predicated region
        $region45: #{tpu_custom_call.1} parent=39 // pred_check
          %p243 = pneg %p65
        $region46: #{tpu_custom_call.1} parent=39 // pred_check_branch
          %245 = sbr.rel (%p243) target = $region48
        $region47: #{tpu_custom_call.1} parent=39 // pred_region
          %246 = dma.done [#allocation6], 4096
        $region48: #{tpu_custom_call.1} parent=39 // pred_fallthru
          _
        // Predicated region
        $region49: #{tpu_custom_call.1} parent=39 // pred_check
          %p247 = pneg %p107
        $region50: #{tpu_custom_call.1} parent=39 // pred_check_branch
          %249 = sbr.rel (%p247) target = $region52
        $region51: #{tpu_custom_call.1} parent=39 // pred_region
          %250 = dma.done [#allocation6], 1024
        $region52: #{tpu_custom_call.1} parent=39 // pred_fallthru
          _
        %s251 = sand.u32 %s31, 1
        %s252 = scalar_lea.sflag [#allocation3], %s251
        %s253 = sand.u32 %s31, 1
        %s254 = smul.addr %s253, 32
        %s255 = scalar_lea.vmem [#allocation2], %s254
        %p256 = pneg %p44
        %p257 = pneg %p41
        %p258 = pneg %p65
        %p259 = pneg %p62
        %p260 = pneg %p86
        %p261 = pneg %p83
        %p262 = pneg %p107
        %p263 = pneg %p104
        %p264 = pneg %p128
        %p265 = pneg %p125
        %p266 = pneg %p154
        %p267 = pneg %p151
        %s268 = sand.u32 %s141, 1
        %s269 = scalar_lea.sflag [#allocation4], %s268
        %s270 = sand.u32 %s141, 1
        %s271 = smul.addr %s270, 16
        %s272 = scalar_lea.vmem [#allocation8], %s271
        %s273 = smul.u32 2, %s23
        %s274 = smul.u32 2, %s23
        %v276 = vld [vmem:[%s238] sm:$0xff]
        %v277 = vld [vmem:[%s238 + $0x8] sm:$0xff]
        %v278 = vld [vmem:[%s238 + $0x10] sm:$0xff]
        %v279 = vld [vmem:[%s238 + $0x18] sm:$0xff]
        %v280 = vld [vmem:[#allocation5] sm:$0xf]
        %v281 = vld [vmem:[#allocation5 + $0x4] sm:$0xf]
        %v282 = vld [vmem:[#allocation5 + $0x8] sm:$0xf]
        %v283 = vld [vmem:[#allocation5 + $0xc] sm:$0xf]
        %v284 = vld [vmem:[#allocation5 + $0x10] sm:$0xf]
        %v285 = vld [vmem:[#allocation5 + $0x14] sm:$0xf]
        %v286 = vld [vmem:[#allocation5 + $0x18] sm:$0xf]
        %v287 = vld [vmem:[#allocation5 + $0x1c] sm:$0xf]
        %v288 = vld [vmem:[#allocation5 + $0x20] sm:$0xf]
        %v289 = vld [vmem:[#allocation5 + $0x24] sm:$0xf]
        %v290 = vld [vmem:[#allocation5 + $0x28] sm:$0xf]
        %v291 = vld [vmem:[#allocation5 + $0x2c] sm:$0xf]
        %v292 = vld [vmem:[#allocation5 + $0x30] sm:$0xf]
        %v293 = vld [vmem:[#allocation5 + $0x34] sm:$0xf]
        %v294 = vld [vmem:[#allocation5 + $0x38] sm:$0xf]
        %v295 = vld [vmem:[#allocation5 + $0x3c] sm:$0xf]
        %v296 = vld [vmem:[#allocation5 + $0x40] sm:$0xf]
        %v297 = vld [vmem:[#allocation5 + $0x44] sm:$0xf]
        %v298 = vld [vmem:[#allocation5 + $0x48] sm:$0xf]
        %v299 = vld [vmem:[#allocation5 + $0x4c] sm:$0xf]
        %v300 = vld [vmem:[#allocation5 + $0x50] sm:$0xf]
        %v301 = vld [vmem:[#allocation5 + $0x54] sm:$0xf]
        %v302 = vld [vmem:[#allocation5 + $0x58] sm:$0xf]
        %v303 = vld [vmem:[#allocation5 + $0x5c] sm:$0xf]
        %v304 = vld [vmem:[#allocation5 + $0x60] sm:$0xf]
        %v305 = vld [vmem:[#allocation5 + $0x64] sm:$0xf]
        %v306 = vld [vmem:[#allocation5 + $0x68] sm:$0xf]
        %v307 = vld [vmem:[#allocation5 + $0x6c] sm:$0xf]
        %v308 = vld [vmem:[#allocation5 + $0x70] sm:$0xf]
        %v309 = vld [vmem:[#allocation5 + $0x74] sm:$0xf]
        %v310 = vld [vmem:[#allocation5 + $0x78] sm:$0xf]
        %v311 = vld [vmem:[#allocation5 + $0x7c] sm:$0xf]
        %v312 = vld [vmem:[#allocation5 + $0x80] sm:$0xf]
        %v313 = vld [vmem:[#allocation5 + $0x84] sm:$0xf]
        %v314 = vld [vmem:[#allocation5 + $0x88] sm:$0xf]
        %v315 = vld [vmem:[#allocation5 + $0x8c] sm:$0xf]
        %v316 = vld [vmem:[#allocation5 + $0x90] sm:$0xf]
        %v317 = vld [vmem:[#allocation5 + $0x94] sm:$0xf]
        %v318 = vld [vmem:[#allocation5 + $0x98] sm:$0xf]
        %v319 = vld [vmem:[#allocation5 + $0x9c] sm:$0xf]
        %v320 = vld [vmem:[#allocation5 + $0xa0] sm:$0xf]
        %v321 = vld [vmem:[#allocation5 + $0xa4] sm:$0xf]
        %v322 = vld [vmem:[#allocation5 + $0xa8] sm:$0xf]
        %v323 = vld [vmem:[#allocation5 + $0xac] sm:$0xf]
        %v324 = vld [vmem:[#allocation5 + $0xb0] sm:$0xf]
        %v325 = vld [vmem:[#allocation5 + $0xb4] sm:$0xf]
        %v326 = vld [vmem:[#allocation5 + $0xb8] sm:$0xf]
        %v327 = vld [vmem:[#allocation5 + $0xbc] sm:$0xf]
        %v328 = vld [vmem:[#allocation5 + $0xc0] sm:$0xf]
        %v329 = vld [vmem:[#allocation5 + $0xc4] sm:$0xf]
        %v330 = vld [vmem:[#allocation5 + $0xc8] sm:$0xf]
        %v331 = vld [vmem:[#allocation5 + $0xcc] sm:$0xf]
        %v332 = vld [vmem:[#allocation5 + $0xd0] sm:$0xf]
        %v333 = vld [vmem:[#allocation5 + $0xd4] sm:$0xf]
        %v334 = vld [vmem:[#allocation5 + $0xd8] sm:$0xf]
        %v335 = vld [vmem:[#allocation5 + $0xdc] sm:$0xf]
        %v336 = vld [vmem:[#allocation5 + $0xe0] sm:$0xf]
        %v337 = vld [vmem:[#allocation5 + $0xe4] sm:$0xf]
        %v338 = vld [vmem:[#allocation5 + $0xe8] sm:$0xf]
        %v339 = vld [vmem:[#allocation5 + $0xec] sm:$0xf]
        %v340 = vld [vmem:[#allocation5 + $0xf0] sm:$0xf]
        %v341 = vld [vmem:[#allocation5 + $0xf4] sm:$0xf]
        %v342 = vld [vmem:[#allocation5 + $0xf8] sm:$0xf]
        %v343 = vld [vmem:[#allocation5 + $0xfc] sm:$0xf]
        %v344 = vld [vmem:[%s2] sm:$0x1]
        %v346 = vlaneseq
        %v347 = vshrl.u32 %v346, 7
        %v348 = vsub.s32 0, %v347
        %v349 = vrot.slane %v344, %v348
        %v355 = vunpack.c.l.b16 %v276
        %v356 = vunpack.c.h.b16 %v276
        %v357 = vunpack.c.l.b16 %v277
        %v358 = vunpack.c.h.b16 %v277
        %v359 = vunpack.c.l.b16 %v278
        %v360 = vunpack.c.h.b16 %v278
        %v361 = vunpack.c.l.b16 %v279
        %v362 = vunpack.c.h.b16 %v279
        %v363 = vpack.c.b16 %v359, %v355
        %v364 = vpack.c.b16 %v360, %v356
        %v365 = vpack.c.b16 %v361, %v357
        %v366 = vpack.c.b16 %v362, %v358
        %v435 = vunpack.c.l.b16 %v280
        %v436 = vunpack.c.l.b16 %v281
        %v437 = vunpack.c.l.b16 %v282
        %v438 = vunpack.c.l.b16 %v283
        %v439 = vunpack.c.l.b16 %v284
        %v440 = vunpack.c.l.b16 %v285
        %v441 = vunpack.c.l.b16 %v286
        %v442 = vunpack.c.l.b16 %v287
        %v443 = vunpack.c.l.b16 %v288
        %v444 = vunpack.c.l.b16 %v289
        %v445 = vunpack.c.l.b16 %v290
        %v446 = vunpack.c.l.b16 %v291
        %v447 = vunpack.c.l.b16 %v292
        %v448 = vunpack.c.l.b16 %v293
        %v449 = vunpack.c.l.b16 %v294
        %v450 = vunpack.c.l.b16 %v295
        %v451 = vunpack.c.l.b16 %v296
        %v452 = vunpack.c.l.b16 %v297
        %v453 = vunpack.c.l.b16 %v298
        %v454 = vunpack.c.l.b16 %v299
        %v455 = vunpack.c.l.b16 %v300
        %v456 = vunpack.c.l.b16 %v301
        %v457 = vunpack.c.l.b16 %v302
        %v458 = vunpack.c.l.b16 %v303
        %v459 = vunpack.c.l.b16 %v304
        %v460 = vunpack.c.l.b16 %v305
        %v461 = vunpack.c.l.b16 %v306
        %v462 = vunpack.c.l.b16 %v307
        %v463 = vunpack.c.l.b16 %v308
        %v464 = vunpack.c.l.b16 %v309
        %v465 = vunpack.c.l.b16 %v310
        %v466 = vunpack.c.l.b16 %v311
        %v467 = vunpack.c.l.b16 %v312
        %v468 = vunpack.c.l.b16 %v313
        %v469 = vunpack.c.l.b16 %v314
        %v470 = vunpack.c.l.b16 %v315
        %v471 = vunpack.c.l.b16 %v316
        %v472 = vunpack.c.l.b16 %v317
        %v473 = vunpack.c.l.b16 %v318
        %v474 = vunpack.c.l.b16 %v319
        %v475 = vunpack.c.l.b16 %v320
        %v476 = vunpack.c.l.b16 %v321
        %v477 = vunpack.c.l.b16 %v322
        %v478 = vunpack.c.l.b16 %v323
        %v479 = vunpack.c.l.b16 %v324
        %v480 = vunpack.c.l.b16 %v325
        %v481 = vunpack.c.l.b16 %v326
        %v482 = vunpack.c.l.b16 %v327
        %v483 = vunpack.c.l.b16 %v328
        %v484 = vunpack.c.l.b16 %v329
        %v485 = vunpack.c.l.b16 %v330
        %v486 = vunpack.c.l.b16 %v331
        %v487 = vunpack.c.l.b16 %v332
        %v488 = vunpack.c.l.b16 %v333
        %v489 = vunpack.c.l.b16 %v334
        %v490 = vunpack.c.l.b16 %v335
        %v491 = vunpack.c.l.b16 %v336
        %v492 = vunpack.c.l.b16 %v337
        %v493 = vunpack.c.l.b16 %v338
        %v494 = vunpack.c.l.b16 %v339
        %v495 = vunpack.c.l.b16 %v340
        %v496 = vunpack.c.l.b16 %v341
        %v497 = vunpack.c.l.b16 %v342
        %v498 = vunpack.c.l.b16 %v343
        %v499 = vpack.c.b16 %v436, %v435
        %v500 = vpack.c.b16 %v438, %v437
        %v501 = vpack.c.b16 %v440, %v439
        %v502 = vpack.c.b16 %v442, %v441
        %v503 = vpack.c.b16 %v444, %v443
        %v504 = vpack.c.b16 %v446, %v445
        %v505 = vpack.c.b16 %v448, %v447
        %v506 = vpack.c.b16 %v450, %v449
        %v507 = vpack.c.b16 %v452, %v451
        %v508 = vpack.c.b16 %v454, %v453
        %v509 = vpack.c.b16 %v456, %v455
        %v510 = vpack.c.b16 %v458, %v457
        %v511 = vpack.c.b16 %v460, %v459
        %v512 = vpack.c.b16 %v462, %v461
        %v513 = vpack.c.b16 %v464, %v463
        %v514 = vpack.c.b16 %v466, %v465
        %v515 = vpack.c.b16 %v468, %v467
        %v516 = vpack.c.b16 %v470, %v469
        %v517 = vpack.c.b16 %v472, %v471
        %v518 = vpack.c.b16 %v474, %v473
        %v519 = vpack.c.b16 %v476, %v475
        %v520 = vpack.c.b16 %v478, %v477
        %v521 = vpack.c.b16 %v480, %v479
        %v522 = vpack.c.b16 %v482, %v481
        %v523 = vpack.c.b16 %v484, %v483
        %v524 = vpack.c.b16 %v486, %v485
        %v525 = vpack.c.b16 %v488, %v487
        %v526 = vpack.c.b16 %v490, %v489
        %v527 = vpack.c.b16 %v492, %v491
        %v528 = vpack.c.b16 %v494, %v493
        %v529 = vpack.c.b16 %v496, %v495
        %v530 = vpack.c.b16 %v498, %v497
        %563 = vmatprep.subr.bf16.mxu0 0
        %564 = vmatpush1.bf16.msra.mxu0 %v499
        %565 = vmatprep.subr.bf16.mxu0 0
        %566 = vmatpush1.bf16.msra.mxu0 %v500
        %567 = vmatprep.subr.bf16.mxu0 0
        %568 = vmatpush1.bf16.msra.mxu0 %v501
        %569 = vmatprep.subr.bf16.mxu0 0
        %570 = vmatpush1.bf16.msra.mxu0 %v502
        %571 = vmatprep.subr.bf16.mxu0 0
        %572 = vmatpush1.bf16.msra.mxu0 %v503
        %573 = vmatprep.subr.bf16.mxu0 0
        %574 = vmatpush1.bf16.msra.mxu0 %v504
        %575 = vmatprep.subr.bf16.mxu0 0
        %576 = vmatpush1.bf16.msra.mxu0 %v505
        %577 = vmatprep.subr.bf16.mxu0 0
        %578 = vmatpush1.bf16.msra.mxu0 %v506
        %579 = vmatprep.subr.bf16.mxu0 0
        %580 = vmatpush1.bf16.msra.mxu0 %v507
        %581 = vmatprep.subr.bf16.mxu0 0
        %582 = vmatpush1.bf16.msra.mxu0 %v508
        %583 = vmatprep.subr.bf16.mxu0 0
        %584 = vmatpush1.bf16.msra.mxu0 %v509
        %585 = vmatprep.subr.bf16.mxu0 0
        %586 = vmatpush1.bf16.msra.mxu0 %v510
        %587 = vmatprep.subr.bf16.mxu0 0
        %588 = vmatpush1.bf16.msra.mxu0 %v511
        %589 = vmatprep.subr.bf16.mxu0 0
        %590 = vmatpush1.bf16.msra.mxu0 %v512
        %591 = vmatprep.subr.bf16.mxu0 0
        %592 = vmatpush1.bf16.msra.mxu0 %v513
        %593 = vmatprep.subr.bf16.mxu0 0
        %594 = vmatpush1.bf16.msra.mxu0 %v514
        %595 = vmatprep.mubr.bf16.mxu0 %v364
        %596 = vmatmul.mubr.bf16.gmra.mrb[0].mxu0 %v363
        %v597 = vpop.f32.mrb[0].mxu0
        %v598 = vadd.f32 %v349, %v597
        %v599 = vpop.f32.mrb[0].mxu0
        %v600 = vpop.f32.mrb[0].mxu0
        %v601 = vadd.f32 %v349, %v600
        %v602 = vpop.f32.mrb[0].mxu0
        %603 = vdwg.mxu0
        %604 = vmatprep.subr.bf16.mxu0 0
        %605 = vmatpush1.bf16.msra.mxu0 %v515
        %606 = vmatprep.subr.bf16.mxu0 0
        %607 = vmatpush1.bf16.msra.mxu0 %v516
        %608 = vmatprep.subr.bf16.mxu0 0
        %609 = vmatpush1.bf16.msra.mxu0 %v517
        %610 = vmatprep.subr.bf16.mxu0 0
        %611 = vmatpush1.bf16.msra.mxu0 %v518
        %612 = vmatprep.subr.bf16.mxu0 0
        %613 = vmatpush1.bf16.msra.mxu0 %v519
        %614 = vmatprep.subr.bf16.mxu0 0
        %615 = vmatpush1.bf16.msra.mxu0 %v520
        %616 = vmatprep.subr.bf16.mxu0 0
        %617 = vmatpush1.bf16.msra.mxu0 %v521
        %618 = vmatprep.subr.bf16.mxu0 0
        %619 = vmatpush1.bf16.msra.mxu0 %v522
        %620 = vmatprep.subr.bf16.mxu0 0
        %621 = vmatpush1.bf16.msra.mxu0 %v523
        %622 = vmatprep.subr.bf16.mxu0 0
        %623 = vmatpush1.bf16.msra.mxu0 %v524
        %624 = vmatprep.subr.bf16.mxu0 0
        %625 = vmatpush1.bf16.msra.mxu0 %v525
        %626 = vmatprep.subr.bf16.mxu0 0
        %627 = vmatpush1.bf16.msra.mxu0 %v526
        %628 = vmatprep.subr.bf16.mxu0 0
        %629 = vmatpush1.bf16.msra.mxu0 %v527
        %630 = vmatprep.subr.bf16.mxu0 0
        %631 = vmatpush1.bf16.msra.mxu0 %v528
        %632 = vmatprep.subr.bf16.mxu0 0
        %633 = vmatpush1.bf16.msra.mxu0 %v529
        %634 = vmatprep.subr.bf16.mxu0 0
        %635 = vmatpush1.bf16.msra.mxu0 %v530
        %636 = vmatprep.mubr.bf16.mxu0 %v366
        %637 = vmatmul.mubr.bf16.gmra.mrb[0].mxu0 %v365
        %v638 = vpop.f32.mrb[0].mxu0
        %v639 = vadd.f32 %v598, %v638
        %v640 = vpop.f32.mrb[0].mxu0
        %v641 = vpop.f32.mrb[0].mxu0
        %v642 = vadd.f32 %v601, %v641
        %v643 = vpop.f32.mrb[0].mxu0
        %644 = vdwg.mxu0
        %v645 = vtanh.pop %v639
        %v646 = vtanh.pop %v642
        %v647 = vpack.c.bf16 %v646, %v645
        %v648 = vld [vmem:[#allocation7] sm:$0xf]
        %v649 = vld [vmem:[#allocation7 + $0x4] sm:$0xf]
        %v650 = vld [vmem:[#allocation7 + $0x8] sm:$0xf]
        %v651 = vld [vmem:[#allocation7 + $0xc] sm:$0xf]
        %v652 = vld [vmem:[#allocation7 + $0x10] sm:$0xf]
        %v653 = vld [vmem:[#allocation7 + $0x14] sm:$0xf]
        %v654 = vld [vmem:[#allocation7 + $0x18] sm:$0xf]
        %v655 = vld [vmem:[#allocation7 + $0x1c] sm:$0xf]
        %v656 = vld [vmem:[#allocation7 + $0x20] sm:$0xf]
        %v657 = vld [vmem:[#allocation7 + $0x24] sm:$0xf]
        %v658 = vld [vmem:[#allocation7 + $0x28] sm:$0xf]
        %v659 = vld [vmem:[#allocation7 + $0x2c] sm:$0xf]
        %v660 = vld [vmem:[#allocation7 + $0x30] sm:$0xf]
        %v661 = vld [vmem:[#allocation7 + $0x34] sm:$0xf]
        %v662 = vld [vmem:[#allocation7 + $0x38] sm:$0xf]
        %v663 = vld [vmem:[#allocation7 + $0x3c] sm:$0xf]
        %v664 = vld [vmem:[%s4] sm:$0x1]
        %v666 = vlaneseq
        %v667 = vshrl.u32 %v666, 7
        %v668 = vsub.s32 0, %v667
        %v669 = vrot.slane %v664, %v668
        %v687 = vunpack.c.l.b16 %v648
        %v688 = vunpack.c.l.b16 %v649
        %v689 = vunpack.c.l.b16 %v650
        %v690 = vunpack.c.l.b16 %v651
        %v691 = vunpack.c.l.b16 %v652
        %v692 = vunpack.c.l.b16 %v653
        %v693 = vunpack.c.l.b16 %v654
        %v694 = vunpack.c.l.b16 %v655
        %v695 = vunpack.c.l.b16 %v656
        %v696 = vunpack.c.l.b16 %v657
        %v697 = vunpack.c.l.b16 %v658
        %v698 = vunpack.c.l.b16 %v659
        %v699 = vunpack.c.l.b16 %v660
        %v700 = vunpack.c.l.b16 %v661
        %v701 = vunpack.c.l.b16 %v662
        %v702 = vunpack.c.l.b16 %v663
        %v703 = vpack.c.b16 %v688, %v687
        %v704 = vpack.c.b16 %v690, %v689
        %v705 = vpack.c.b16 %v692, %v691
        %v706 = vpack.c.b16 %v694, %v693
        %v707 = vpack.c.b16 %v696, %v695
        %v708 = vpack.c.b16 %v698, %v697
        %v709 = vpack.c.b16 %v700, %v699
        %v710 = vpack.c.b16 %v702, %v701
        %719 = vmatprep.subr.bf16.mxu0 0
        %720 = vmatpush1.bf16.msra.mxu0 %v703
        %721 = vmatprep.subr.bf16.mxu0 0
        %722 = vmatpush1.bf16.msra.mxu0 %v704
        %723 = vmatprep.subr.bf16.mxu0 0
        %724 = vmatpush1.bf16.msra.mxu0 %v705
        %725 = vmatprep.subr.bf16.mxu0 0
        %726 = vmatpush1.bf16.msra.mxu0 %v706
        %727 = vmatprep.subr.bf16.mxu0 0
        %728 = vmatpush1.bf16.msra.mxu0 %v707
        %729 = vmatprep.subr.bf16.mxu0 0
        %730 = vmatpush1.bf16.msra.mxu0 %v708
        %731 = vmatprep.subr.bf16.mxu0 0
        %732 = vmatpush1.bf16.msra.mxu0 %v709
        %733 = vmatprep.subr.bf16.mxu0 0
        %734 = vmatpush1.bf16.msra.mxu0 %v710
        %735 = vmatprep.subr.bf16.mxu0 0
        %736 = vmatpush1.bf16.msra.mxu0 0
        %737 = vmatprep.subr.bf16.mxu0 0
        %738 = vmatpush1.bf16.msra.mxu0 0
        %739 = vmatprep.subr.bf16.mxu0 0
        %740 = vmatpush1.bf16.msra.mxu0 0
        %741 = vmatprep.subr.bf16.mxu0 0
        %742 = vmatpush1.bf16.msra.mxu0 0
        %743 = vmatprep.subr.bf16.mxu0 0
        %744 = vmatpush1.bf16.msra.mxu0 0
        %745 = vmatprep.subr.bf16.mxu0 0
        %746 = vmatpush1.bf16.msra.mxu0 0
        %747 = vmatprep.subr.bf16.mxu0 0
        %748 = vmatpush1.bf16.msra.mxu0 0
        %749 = vmatprep.subr.bf16.mxu0 0
        %750 = vmatpush1.bf16.msra.mxu0 0
        %751 = vmatprep.mubr.bf16.mxu0 0
        %752 = vmatmul.mubr.bf16.gmra.mrb[0].mxu0 %v647
        %v753 = vpop.f32.mrb[0].mxu0
        %v754 = vadd.f32 %v669, %v753
        %v755 = vpop.f32.mrb[0].mxu0
        %v756 = vpop.f32.mrb[0].mxu0
        %v757 = vadd.f32 %v669, %v756
        %v758 = vpop.f32.mrb[0].mxu0
        %759 = vdwg.mxu0
        %v760 = vmul.f32 %v754, 1.442695
        %v761 = vpow.pop %v760
        %v762 = vmul.f32 %v757, 1.442695
        %v763 = vpow.pop %v762
        %764 = vadd.xlane.f32.xlu0 %v761
        %v765 = vpop.xlane.xlu0 %764
        %766 = vadd.xlane.f32.xlu0 %v763
        %v767 = vpop.xlane.xlu0 %766
        %v768 = vrcp.pop %v765
        %v769 = vmul.f32 %v761, %v768
        %v770 = vrcp.pop %v767
        %v771 = vmul.f32 %v763, %v770
        %v772 = vadd.f32 %v645, %v769
        %v773 = vadd.f32 %v646, %v771
        %774 = vst [vmem:[%s272] sm:$0xff] %v772
        %775 = vst [vmem:[%s272 + $0x8] sm:$0xff] %v773
        %s776 = sand.u32 %s141, 1
        %s777 = scalar_lea.sflag [#allocation4], %s776
        %s778 = sand.u32 %s141, 1
        %s779 = smul.addr %s778, 16
        %s780 = scalar_lea.vmem [#allocation8], %s779
        // Predicated region
        $region53: #{tpu_custom_call.1} parent=39 // pred_check
          %p781 = pneg %p151
        $region54: #{tpu_custom_call.1} parent=39 // pred_check_branch
          %783 = sbr.rel (%p781) target = $region56
        $region55: #{tpu_custom_call.1} parent=39 // pred_region
          %s784 = smul.u32 2, %s23
          %s786 = ssub.s32 256, 256
          %787 = vsyncadd %s777, %s786
          %s788 = smul.addr %s784, 128
          %s789 = scalar_lea.hbm %s5, %s788
          %s790 = sshll.u32 %s780, 4
          %s791 = int_to_ptr.vmem [resolvable:$true] %s790
          %796 = dma.vmem_to_hbm [thread:$0]  %s791, 256, %s789, %s777, 128, 128, 8
        $region56: #{tpu_custom_call.1} parent=39 // pred_fallthru
          _
      $region40: #{tpu_custom_call.1} parent=5 // pred_fallthru
        _
      %p797 = scmp.le.s32.totalorder 2, %s18
      // Predicated region
      $region57: #{tpu_custom_call.1} parent=5 // pred_check
        %p798 = pneg %p797
      $region58: #{tpu_custom_call.1} parent=5 // pred_check_branch
        %800 = sbr.rel (%p798) target = $region60
      $region59: #{tpu_custom_call.1} parent=5 // pred_region
        %s801 = ssub.s32 %s18, 2
        // Predicated region
        $region61: #{tpu_custom_call.1} parent=59 // pred_check
          %p802 = pneg %p157
        $region62: #{tpu_custom_call.1} parent=59 // pred_check_branch
          %804 = sbr.rel (%p802) target = $region64
        $region63: #{tpu_custom_call.1} parent=59 // pred_region
          %s805 = sand.u32 %s142, 1
          %s806 = scalar_lea.sflag [#allocation4], %s805
          %s807 = sand.u32 %s142, 1
          %s808 = smul.addr %s807, 16
          %s809 = scalar_lea.vmem [#allocation8], %s808
          %810 = dma.done %s806, 256
        $region64: #{tpu_custom_call.1} parent=59 // pred_fallthru
          _
      $region60: #{tpu_custom_call.1} parent=5 // pred_fallthru
        _
    $region6: #{tpu_custom_call.1} parent=1 // loop_footer
      %s22 = sadd.s32 1, %s18
    $region7: #{tpu_custom_call.1} parent=1 // loop_footer_branch
      %17 = sbr.rel target = $region3
    $region8: #{tpu_custom_call.1} parent=1 // loop_exit
      _
    %811 = vsyncpa [#allocation3], 1
    %s812 = scalar_lea.sflag [#allocation3], 1
    %813 = vsyncpa %s812, 1
    %814 = vsyncpa [#allocation6], 1
    %815 = vsyncpa [#allocation4], 1
    %s816 = scalar_lea.sflag [#allocation4], 1
    %817 = vsyncpa %s816, 1

</llo_original>
